<compile_context>
chip_gen: v7x
topology: tpu7x:2x2x1
jax: 0.10.0
libtpu: 0.0.40
codegen_flags: <defaults>
</compile_context>

<pallas_src>
import math

import jax
import jax.numpy as jnp
from jax.experimental import pallas as pl
from jax.experimental.pallas import tpu as pltpu


def _choose_dst_tile(HW, sel_itemsize):
    """Destination-tile width: multiple of 128 (or full HW), sel tile <= ~8 MiB."""
    max_sel_bytes = 8 << 20
    budget_cols = max(128, (max_sel_bytes // max(HW * sel_itemsize, 1)) // 128 * 128)
    if HW <= budget_cols:
        return HW  # single destination tile
    t = min(budget_cols, 2048)
    for cand in range(t, 127, -128):  # prefer an even divisor (no padded edge tile)
        if HW % cand == 0:
            return cand
    return t  # padded edge tile handled by cdiv grid (writes past HW are dropped)


def _make_rotate_kernel(H, W, T_dst, sel_dtype, compute_dtype):
    HW = H * W
    inv_w = 1.0 / W
    cy = (H - 1) * 0.5
    cx = (W - 1) * 0.5

    def kernel(trig_ref, x_ref, o_ref, sel_ref):
        d_idx = pl.program_id(0)   # destination tile (outer, parallel)
        nc_idx = pl.program_id(1)  # N*C row tile (inner, arbitrary)

        # Build the one-hot selection matrix once per destination tile.
        @pl.when(nc_idx == 0)
        def _build_sel():
            cos_t = trig_ref[0]
            sin_t = trig_ref[1]

            # --- destination-only math at (1, T_dst) ---
            col = jax.lax.broadcasted_iota(jnp.int32, (1, T_dst), 1)
            dst = col + d_idx * T_dst
            dst_f = dst.astype(jnp.float32)

            # Exact yd = dst // W, xd = dst % W via corrected f32 division
            # (all quantities are integers <= 2^24, so the fixup is exact).
            yd = jnp.floor(dst_f * inv_w)
            rem = dst_f - yd * W
            yd = yd + jnp.where(rem >= W, 1.0, 0.0) - jnp.where(rem < 0, 1.0, 0.0)
            xd = dst_f - yd * W

            dy = yd - cy
            dx = xd - cx

            # torchvision convention: positive angle = counter-clockwise;
            # inverse (dest -> source) map uses R(+theta).
            xs = cos_t * dx - sin_t * dy + cx
            ys = sin_t * dx + cos_t * dy + cy

            ixs = jnp.round(xs).astype(jnp.int32)  # round-half-even (grid_sample)
            iys = jnp.round(ys).astype(jnp.int32)
            valid = (ixs >= 0) & (ixs < W) & (iys >= 0) & (iys < H)
            # Fold the bounds mask into the index: -1 never matches -> fill 0.
            src_flat = jnp.where(valid, iys * W + ixs, -1)  # (1, T_dst)

            # --- only 2-D work: one compare + one select per sel element ---
            src_iota = jax.lax.broadcasted_iota(jnp.int32, (HW, T_dst), 0)
            sel_ref[...] = jnp.where(
                src_iota == src_flat,
                jnp.ones((), sel_dtype),
                jnp.zeros((), sel_dtype),
            )

        # One-hot gather on the MXU; exact for f32/f32 and bf16/bf16 operands.
        o_ref[...] = jnp.dot(
            x_ref[...].astype(compute_dtype),
            sel_ref[...],
            preferred_element_type=jnp.float32,
        ).astype(o_ref.dtype)

    return kernel


def rotate_by_distribution(img, key, std_deg=34.0):
    """Rotate an NCHW image batch by an angle sampled from Normal(0, std_deg)."""
    N, C, H, W = img.shape
    NC = N * C
    HW = H * W

    # Angle sampling (plain-JAX glue, mirrors distribution.sample()).
    degree = jax.random.normal(key, (), dtype=jnp.float32) * std_deg
    theta = degree * (math.pi / 180.0)
    trig = jnp.stack([jnp.cos(theta), jnp.sin(theta)]).astype(jnp.float32)

    # bf16 images: bf16 sel + bf16 MXU operands (still exact for a one-hot).
    # Everything else: f32 sel so output pixels are bit-exact input copies.
    if img.dtype == jnp.bfloat16:
        sel_dtype = jnp.bfloat16
        compute_dtype = jnp.bfloat16
    else:
        sel_dtype = jnp.float32
        compute_dtype = jnp.float32

    sel_itemsize = jnp.dtype(sel_dtype).itemsize
    x_itemsize = jnp.dtype(img.dtype).itemsize

    T_dst = _choose_dst_tile(HW, sel_itemsize)
    T_nc = NC if NC <= 256 else 256  # fill the MXU M dim when batches are large

    n_dst = pl.cdiv(HW, T_dst)
    n_nc = pl.cdiv(NC, T_nc)

    x_flat = img.reshape(NC, HW)
    kernel = _make_rotate_kernel(H, W, T_dst, sel_dtype, compute_dtype)

    # Rough VMEM footprint: sel scratch + double-buffered x / out blocks.
    vmem_bytes = (HW * T_dst * sel_itemsize
                  + 2 * T_nc * HW * x_itemsize
                  + 2 * T_nc * T_dst * x_itemsize)
    compiler_kwargs = dict(dimension_semantics=("parallel", "arbitrary"))
    if vmem_bytes > (12 << 20):
        compiler_kwargs["vmem_limit_bytes"] = int(min(2 * vmem_bytes, 48 << 20))

    cost = pl.CostEstimate(
        flops=2 * NC * HW * HW,
        transcendentals=0,
        bytes_accessed=(2 * NC * HW * x_itemsize) + trig.size * 4,
    )

    out_flat = pl.pallas_call(
        kernel,
        out_shape=jax.ShapeDtypeStruct((NC, HW), img.dtype),
        grid=(n_dst, n_nc),
        in_specs=[
            pl.BlockSpec(memory_space=pltpu.MemorySpace.SMEM),        # [cos, sin]
            pl.BlockSpec((T_nc, HW), lambda d, n: (n, 0)),            # source rows
        ],
        out_specs=pl.BlockSpec((T_nc, T_dst), lambda d, n: (n, d)),   # lane-dense out
        scratch_shapes=[pltpu.VMEM((HW, T_dst), sel_dtype)],          # cached sel tile
        compiler_params=pltpu.CompilerParams(**compiler_kwargs),
        cost_estimate=cost,
    )(trig, x_flat)

    return out_flat.reshape(N, C, H, W)


def _reference_rotate(img, cos_t, sin_t):
    """Pure-JAX reference with identical index math (for sanity checking)."""
    N, C, H, W = img.shape
    cy = (H - 1) * 0.5
    cx = (W - 1) * 0.5
    yd, xd = jnp.meshgrid(jnp.arange(H, dtype=jnp.float32),
                          jnp.arange(W, dtype=jnp.float32), indexing="ij")
    dy = yd - cy
    dx = xd - cx
    xs = cos_t * dx - sin_t * dy + cx
    ys = sin_t * dx + cos_t * dy + cy
    ixs = jnp.round(xs).astype(jnp.int32)
    iys = jnp.round(ys).astype(jnp.int32)
    valid = (ixs >= 0) & (ixs < W) & (iys >= 0) & (iys < H)
    ixs_c = jnp.clip(ixs, 0, W - 1)
    iys_c = jnp.clip(iys, 0, H - 1)
    gathered = img[:, :, iys_c, ixs_c]
    return jnp.where(valid[None, None], gathered, 0).astype(img.dtype)


if __name__ == "__main__":
    key = jax.random.PRNGKey(0)
    k_img, k_angle = jax.random.split(key)

    # Small NCHW input consistent with the module's forward (an image batch).
    img = jax.random.uniform(k_img, (2, 4, 16, 16), dtype=jnp.float32)

    out = rotate_by_distribution(img, k_angle)
    jax.block_until_ready(out)

    assert out.shape == img.shape
    assert out.dtype == img.dtype
    assert bool(jnp.all(jnp.isfinite(out)))

    # Sanity check against a pure-JAX reference with the same angle / mapping.
    degree = jax.random.normal(k_angle, (), dtype=jnp.float32) * 34.0
    theta = degree * (math.pi / 180.0)
    ref = _reference_rotate(img, jnp.cos(theta), jnp.sin(theta))
    # Allow a vanishing fraction of knife-edge rounding disagreements between
    # the in-kernel VPU path and the XLA reference path.
    mismatch = float(jnp.mean((out != ref).astype(jnp.float32)))
    assert mismatch < 0.005, f"mismatch fraction too high: {mismatch}"

    print("KERNEL_OK")
</pallas_src>

<mosaic_0001>
module attributes {stable_mosaic.version = 11 : i64} {
  func.func @kernel(%arg0: i32, %arg1: i32, %arg2: memref<2xf32, #tpu.memory_space<smem>>, %arg3: memref<8x256xf32, #tpu.memory_space<vmem>>, %arg4: memref<8x256xf32, #tpu.memory_space<vmem>>, %arg5: memref<256x256xf32, #tpu.memory_space<vmem>>) attributes {dimension_semantics = [#tpu.dimension_semantics<parallel>, #tpu.dimension_semantics<arbitrary>], iteration_bounds = array<i64: 1, 1>, scalar_prefetch = 0 : i64, scratch_operands = 1 : i64, tpu.core_type = #tpu.core_type<tc>, window_params = [{transform_indices = @transform_0, window_bounds = array<i64: 2>}, {transform_indices = @transform_1, window_bounds = array<i64: 8, 256>}, {transform_indices = @transform_2, window_bounds = array<i64: 8, 256>}]} {
    %c0_i32 = arith.constant 0 : i32
    %0 = arith.cmpi eq, %arg1, %c0_i32 : i32
    %1 = arith.extui %0 : i1 to i32
    %c0_i32_0 = arith.constant 0 : i32
    %2 = arith.cmpi ne, %1, %c0_i32_0 : i32
    scf.if %2 {
      %c0_6 = arith.constant 0 : index
      %7 = memref.load %arg2[%c0_6] : memref<2xf32, #tpu.memory_space<smem>>
      %c1 = arith.constant 1 : index
      %8 = memref.load %arg2[%c1] : memref<2xf32, #tpu.memory_space<smem>>
      %9 = tpu.iota {dimensions = array<i32: 1>} : vector<1x256xi32>
      %c256_i32 = arith.constant 256 : i32
      %10 = arith.muli %arg0, %c256_i32 : i32
      %11 = vector.broadcast %10 : i32 to vector<1x256xi32>
      %12 = arith.addi %9, %11 : vector<1x256xi32>
      %13 = arith.sitofp %12 : vector<1x256xi32> to vector<1x256xf32>
      %cst_7 = arith.constant 6.250000e-02 : f32
      %14 = vector.broadcast %cst_7 : f32 to vector<1x256xf32>
      %15 = arith.mulf %13, %14 : vector<1x256xf32>
      %16 = math.floor %15 : vector<1x256xf32>
      %cst_8 = arith.constant 1.600000e+01 : f32
      %17 = vector.broadcast %cst_8 : f32 to vector<1x256xf32>
      %18 = arith.mulf %16, %17 : vector<1x256xf32>
      %19 = arith.subf %13, %18 : vector<1x256xf32>
      %cst_9 = arith.constant 1.600000e+01 : f32
      %20 = vector.broadcast %cst_9 : f32 to vector<1x256xf32>
      %21 = arith.cmpf oge, %19, %20 : vector<1x256xf32>
      %cst_10 = arith.constant 1.000000e+00 : f32
      %cst_11 = arith.constant 0.000000e+00 : f32
      %22 = vector.broadcast %cst_10 : f32 to vector<1x256xf32>
      %23 = vector.broadcast %cst_11 : f32 to vector<1x256xf32>
      %24 = arith.select %21, %22, %23 : vector<1x256xi1>, vector<1x256xf32>
      %25 = arith.addf %16, %24 : vector<1x256xf32>
      %cst_12 = arith.constant 0.000000e+00 : f32
      %26 = vector.broadcast %cst_12 : f32 to vector<1x256xf32>
      %27 = arith.cmpf olt, %19, %26 : vector<1x256xf32>
      %cst_13 = arith.constant 1.000000e+00 : f32
      %cst_14 = arith.constant 0.000000e+00 : f32
      %28 = vector.broadcast %cst_13 : f32 to vector<1x256xf32>
      %29 = vector.broadcast %cst_14 : f32 to vector<1x256xf32>
      %30 = arith.select %27, %28, %29 : vector<1x256xi1>, vector<1x256xf32>
      %31 = arith.subf %25, %30 : vector<1x256xf32>
      %cst_15 = arith.constant 1.600000e+01 : f32
      %32 = vector.broadcast %cst_15 : f32 to vector<1x256xf32>
      %33 = arith.mulf %31, %32 : vector<1x256xf32>
      %34 = arith.subf %13, %33 : vector<1x256xf32>
      %cst_16 = arith.constant 7.500000e+00 : f32
      %35 = vector.broadcast %cst_16 : f32 to vector<1x256xf32>
      %36 = arith.subf %31, %35 : vector<1x256xf32>
      %cst_17 = arith.constant 7.500000e+00 : f32
      %37 = vector.broadcast %cst_17 : f32 to vector<1x256xf32>
      %38 = arith.subf %34, %37 : vector<1x256xf32>
      %39 = vector.broadcast %7 : f32 to vector<1x256xf32>
      %40 = arith.mulf %39, %38 : vector<1x256xf32>
      %41 = vector.broadcast %8 : f32 to vector<1x256xf32>
      %42 = arith.mulf %41, %36 : vector<1x256xf32>
      %43 = arith.subf %40, %42 : vector<1x256xf32>
      %cst_18 = arith.constant 7.500000e+00 : f32
      %44 = vector.broadcast %cst_18 : f32 to vector<1x256xf32>
      %45 = arith.addf %43, %44 : vector<1x256xf32>
      %46 = vector.broadcast %8 : f32 to vector<1x256xf32>
      %47 = arith.mulf %46, %38 : vector<1x256xf32>
      %48 = vector.broadcast %7 : f32 to vector<1x256xf32>
      %49 = arith.mulf %48, %36 : vector<1x256xf32>
      %50 = arith.addf %47, %49 : vector<1x256xf32>
      %cst_19 = arith.constant 7.500000e+00 : f32
      %51 = vector.broadcast %cst_19 : f32 to vector<1x256xf32>
      %52 = arith.addf %50, %51 : vector<1x256xf32>
      %53 = math.roundeven %45 : vector<1x256xf32>
      %54 = arith.fptosi %53 : vector<1x256xf32> to vector<1x256xi32>
      %55 = math.roundeven %52 : vector<1x256xf32>
      %56 = arith.fptosi %55 : vector<1x256xf32> to vector<1x256xi32>
      %c0_i32_20 = arith.constant 0 : i32
      %57 = vector.broadcast %c0_i32_20 : i32 to vector<1x256xi32>
      %58 = arith.cmpi sge, %54, %57 : vector<1x256xi32>
      %c16_i32 = arith.constant 16 : i32
      %59 = vector.broadcast %c16_i32 : i32 to vector<1x256xi32>
      %60 = arith.cmpi slt, %54, %59 : vector<1x256xi32>
      %61 = arith.andi %58, %60 : vector<1x256xi1>
      %c0_i32_21 = arith.constant 0 : i32
      %62 = vector.broadcast %c0_i32_21 : i32 to vector<1x256xi32>
      %63 = arith.cmpi sge, %56, %62 : vector<1x256xi32>
      %64 = arith.andi %61, %63 : vector<1x256xi1>
      %c16_i32_22 = arith.constant 16 : i32
      %65 = vector.broadcast %c16_i32_22 : i32 to vector<1x256xi32>
      %66 = arith.cmpi slt, %56, %65 : vector<1x256xi32>
      %67 = arith.andi %64, %66 : vector<1x256xi1>
      %c16_i32_23 = arith.constant 16 : i32
      %68 = vector.broadcast %c16_i32_23 : i32 to vector<1x256xi32>
      %69 = arith.muli %56, %68 : vector<1x256xi32>
      %70 = arith.addi %69, %54 : vector<1x256xi32>
      %c-1_i32 = arith.constant -1 : i32
      %71 = vector.broadcast %c-1_i32 : i32 to vector<1x256xi32>
      %72 = arith.select %67, %70, %71 : vector<1x256xi1>, vector<1x256xi32>
      %73 = tpu.iota {dimensions = array<i32: 0>} : vector<256x256xi32>
      %74 = vector.broadcast %72 : vector<1x256xi32> to vector<256x256xi32>
      %75 = arith.cmpi eq, %73, %74 : vector<256x256xi32>
      %cst_24 = arith.constant 1.000000e+00 : f32
      %cst_25 = arith.constant 0.000000e+00 : f32
      %76 = vector.broadcast %cst_24 : f32 to vector<256x256xf32>
      %77 = vector.broadcast %cst_25 : f32 to vector<256x256xf32>
      %78 = arith.select %75, %76, %77 : vector<256x256xi1>, vector<256x256xf32>
      %c0_26 = arith.constant 0 : index
      %c0_27 = arith.constant 0 : index
      %79 = vector.load %arg5[%c0_26, %c0_27] : memref<256x256xf32, #tpu.memory_space<vmem>>, vector<256x256xf32>
      tpu.vector_store %arg5[%c0_26, %c0_27], %78 {strides = array<i32>} : memref<256x256xf32, #tpu.memory_space<vmem>>, vector<256x256xf32>,
    } else {
    }
    %c0 = arith.constant 0 : index
    %c0_1 = arith.constant 0 : index
    %3 = vector.load %arg3[%c0, %c0_1] : memref<8x256xf32, #tpu.memory_space<vmem>>, vector<8x256xf32>
    %c0_2 = arith.constant 0 : index
    %c0_3 = arith.constant 0 : index
    %4 = vector.load %arg5[%c0_2, %c0_3] : memref<256x256xf32, #tpu.memory_space<vmem>>, vector<256x256xf32>
    %cst = arith.constant dense<0.000000e+00> : vector<8x256xf32>
    %5 = tpu.matmul %3, %4, %cst {dimension_numbers = #tpu.dot_dimension_numbers<[1], [0], [0], [1], [0, 0, 1, 1], [], []>} : vector<8x256xf32>, vector<256x256xf32>, vector<8x256xf32> -> vector<8x256xf32>
    %c0_4 = arith.constant 0 : index
    %c0_5 = arith.constant 0 : index
    %6 = vector.load %arg4[%c0_4, %c0_5] : memref<8x256xf32, #tpu.memory_space<vmem>>, vector<8x256xf32>
    tpu.vector_store %arg4[%c0_4, %c0_5], %5 {strides = array<i32>} : memref<8x256xf32, #tpu.memory_space<vmem>>, vector<8x256xf32>,
    return
  }
  func.func @transform_0(%arg0: i32, %arg1: i32) -> i32 {
    %c0_i32 = arith.constant 0 : i32
    %c0_i32_0 = arith.constant 0 : i32
    return %c0_i32 : i32
  }
  func.func @transform_1(%arg0: i32, %arg1: i32) -> (i32, i32) {
    %c0_i32 = arith.constant 0 : i32
    %c0_i32_0 = arith.constant 0 : i32
    return %arg1, %c0_i32 : i32, i32
  }
  func.func @transform_2(%arg0: i32, %arg1: i32) -> (i32, i32) {
    %c0_i32 = arith.constant 0 : i32
    return %arg1, %arg0 : i32, i32
  }
}

</mosaic_0001>

<llo_original>
// kernel: tpu_custom_call.1
$region0: #{tpu_custom_call.1}
  #allocation0 [shape = 'u32[]', space=smem, size = 0x4, offset = 0x4, fixed_abs, tag = 'smem constant byte address 0x4 - core index']
  #allocation1 [shape = 'u32[144,128]{1,0:T(1,128)}', space=vmem, size = 0x12000, scoped, tag = 'internal scratch']
  #allocation2 [shape = 'f32[256,256]{1,0:T(8,128)}', space=vmem, size = 0x40000, scoped, tag = 'scratch operand']
  %s0 = inlined_call_operand.hbm [shape: f32[2], index: 0, kind: input, shape index: {}]
  %s1 = inlined_call_operand.hbm [shape: f32[8,256], index: 1, kind: input, shape index: {}]
  %s2 = inlined_call_operand.hbm [shape: f32[8,256], index: 2, kind: output, shape index: {}]
  %s3 = sld [smem:[#allocation0]]
  $region30: #{tpu_custom_call.1} parent=0
    _
  %s5 = ssub.s32 1, %s3
  %s6 = scalar_select 0, %s5, %s3
  $region1: #{tpu_custom_call.1} parent=0
    #allocation3 [shape = 'u8[512]{0}', space=smem, size = 0x200, scoped, tag = 'input window, operand 0, single buffered']
    #allocation4 [shape = 's32[1]{0}', space=sflag, size = 0x4, scoped, tag = 'scoped memory for tpu_custom_call.1']
    #allocation5 [shape = 's32[1]{0}', space=sflag, size = 0x4, scoped, tag = 'scoped memory for tpu_custom_call.1']
    #allocation6 [shape = 's32[1]{0}', space=sflag, size = 0x4, scoped, tag = 'scoped memory for tpu_custom_call.1']
    #allocation7 [shape = 'u8[8192]{0}', space=vmem, size = 0x2000, scoped, tag = 'input window, operand 1, single buffered']
    #allocation8 [shape = 'u8[8192]{0}', space=vmem, size = 0x2000, scoped, tag = 'output window, operand 0, single buffered']
    %7 = vsyncpa [#allocation6], 0
    %8 = vsyncpa [#allocation4], 0
    %9 = vsyncpa [#allocation5], 0
    // Predicated region
    $region2: #{tpu_custom_call.1} parent=1 // pred_check
      _
    $region3: #{tpu_custom_call.1} parent=1 // pred_check_branch
      %11 = sbr.rel (0) target = $region5
    $region4: #{tpu_custom_call.1} parent=1 // pred_region
      %s13 = ssub.s32 16, 16
      %14 = vsyncadd [#allocation6], %s13
      %17 = dma.hbm_to_smem %s0, 16, [#allocation3], [#allocation6]
    $region5: #{tpu_custom_call.1} parent=1 // pred_fallthru
      _
    // Predicated region
    $region6: #{tpu_custom_call.1} parent=1 // pred_check
      _
    $region7: #{tpu_custom_call.1} parent=1 // pred_check_branch
      %19 = sbr.rel (0) target = $region9
    $region8: #{tpu_custom_call.1} parent=1 // pred_region
      %s21 = ssub.s32 256, 256
      %22 = vsyncadd [#allocation4], %s21
      %s24 = sshll.u32 [#allocation7], 4
      %s25 = int_to_ptr.vmem [resolvable:$true] %s24
      %27 = dma.hbm_to_vmem [thread:$0]  %s1, 256, %s25, [#allocation4]
    $region9: #{tpu_custom_call.1} parent=1 // pred_fallthru
      _
    // Predicated region
    $region10: #{tpu_custom_call.1} parent=1 // pred_check
      _
    $region11: #{tpu_custom_call.1} parent=1 // pred_check_branch
      %29 = sbr.rel (0) target = $region13
    $region12: #{tpu_custom_call.1} parent=1 // pred_region
      %30 = dma.done [#allocation6], 16
    $region13: #{tpu_custom_call.1} parent=1 // pred_fallthru
      _
    // Predicated region
    $region14: #{tpu_custom_call.1} parent=1 // pred_check
      _
    $region15: #{tpu_custom_call.1} parent=1 // pred_check_branch
      %32 = sbr.rel (0) target = $region17
    $region16: #{tpu_custom_call.1} parent=1 // pred_region
      %33 = dma.done [#allocation4], 256
    $region17: #{tpu_custom_call.1} parent=1 // pred_fallthru
      _
    %34 = sfence
    %p35 = scmp.eq.s32.totalorder 0, 0
    // Predicated region
    $region18: #{tpu_custom_call.1} parent=1 // pred_check
      %p36 = pneg %p35
    $region19: #{tpu_custom_call.1} parent=1 // pred_check_branch
      %38 = sbr.rel (%p36) target = $region21
    $region20: #{tpu_custom_call.1} parent=1 // pred_region
      %s39 = sld [smem:[#allocation3]]
      %s40 = sld [smem:[#allocation3 + $0x1]]
      %v41 = vlaneseq
      %v42 = vand.u32 %v41, 127
      %v43 = vadd.s32 %v42, 128
      %s44 = smul.u32 0, 256
      %v45 = vstv %s44
      %v46 = vadd.s32 %v42, %v45
      %v47 = vadd.s32 %v43, %v45
      %v48 = vcvt.s32.f32 %v46
      %v49 = vcvt.s32.f32 %v47
      %v50 = vmul.f32 %v48, 0.0625
      %v51 = vmul.f32 %v49, 0.0625
      %v52 = vfloor.f32 %v50
      %v53 = vfloor.f32 %v51
      %v54 = vmul.f32 %v52, 16.0
      %v55 = vmul.f32 %v53, 16.0
      %v56 = vsub.f32 %v48, %v54
      %v57 = vsub.f32 %v49, %v55
      %vm58 = vcmp.ge.f32.partialorder %v56, 16.0
      %vm59 = vcmp.ge.f32.partialorder %v57, 16.0
      %v60 = vsel %vm58, 1.0, 0.0
      %v61 = vsel %vm59, 1.0, 0.0
      %v62 = vadd.f32 %v52, %v60
      %v63 = vadd.f32 %v53, %v61
      %vm64 = vcmp.lt.f32.partialorder %v56, 0.0
      %vm65 = vcmp.lt.f32.partialorder %v57, 0.0
      %v66 = vsel %vm64, 1.0, 0.0
      %v67 = vsel %vm65, 1.0, 0.0
      %v68 = vsub.f32 %v62, %v66
      %v69 = vsub.f32 %v63, %v67
      %v70 = vmul.f32 %v68, 16.0
      %v71 = vmul.f32 %v69, 16.0
      %v72 = vsub.f32 %v48, %v70
      %v73 = vsub.f32 %v49, %v71
      %v74 = vsub.f32 %v68, 7.5
      %v75 = vsub.f32 %v69, 7.5
      %v76 = vsub.f32 %v72, 7.5
      %v77 = vsub.f32 %v73, 7.5
      %v78 = vstv %s39
      %v79 = vmul.f32 %v78, %v76
      %v80 = vmul.f32 %v78, %v77
      %v81 = vstv %s40
      %v82 = vmul.f32 %v81, %v74
      %v83 = vmul.f32 %v81, %v75
      %v84 = vsub.f32 %v79, %v82
      %v85 = vsub.f32 %v80, %v83
      %v86 = vadd.f32 %v84, 7.5
      %v87 = vadd.f32 %v85, 7.5
      %v88 = vmul.f32 %v81, %v76
      %v89 = vmul.f32 %v81, %v77
      %v90 = vmul.f32 %v78, %v74
      %v91 = vmul.f32 %v78, %v75
      %v92 = vadd.f32 %v88, %v90
      %v93 = vadd.f32 %v89, %v91
      %v94 = vadd.f32 %v92, 7.5
      %v95 = vadd.f32 %v93, 7.5
      %v96 = vcvt.f32.s32.ties.to.even %v86
      %v97 = vcvt.f32.s32.ties.to.even %v87
      %v98 = vcvt.f32.s32.ties.to.even %v94
      %v99 = vcvt.f32.s32.ties.to.even %v95
      %vm100 = vcmp.ge.s32.totalorder %v96, 0
      %vm101 = vcmp.ge.s32.totalorder %v97, 0
      %vm102 = vcmp.lt.s32.totalorder %v96, 16
      %vm103 = vcmp.lt.s32.totalorder %v97, 16
      %vm104 = vmand %vm100, %vm102
      %vm105 = vmand %vm101, %vm103
      %vm106 = vcmp.ge.s32.totalorder %v98, 0
      %vm107 = vcmp.ge.s32.totalorder %v99, 0
      %vm108 = vmand %vm104, %vm106
      %vm109 = vmand %vm105, %vm107
      %vm110 = vcmp.lt.s32.totalorder %v98, 16
      %vm111 = vcmp.lt.s32.totalorder %v99, 16
      %vm112 = vmand %vm108, %vm110
      %vm113 = vmand %vm109, %vm111
      %v114 = vmul.u32 %v98, 16
      %v115 = vmul.u32 %v99, 16
      %v116 = vadd.s32 %v114, %v96
      %v117 = vadd.s32 %v115, %v97
      %v118 = vsel %vm112, %v116, 4294967295
      %v119 = vsel %vm113, %v117, 4294967295
      %v120 = vlaneseq
      %v121 = vshrl.u32 %v120, 7
      %v122 = vadd.s32 %v121, 8
      %v123 = vadd.s32 %v121, 16
      %v124 = vadd.s32 %v121, 24
      %v125 = vadd.s32 %v121, 32
      %v126 = vadd.s32 %v121, 40
      %v127 = vadd.s32 %v121, 48
      %v128 = vadd.s32 %v121, 56
      %v129 = vadd.s32 %v121, 64
      %v130 = vadd.s32 %v121, 72
      %v131 = vadd.s32 %v121, 80
      %v132 = vadd.s32 %v121, 88
      %v133 = vadd.s32 %v121, 96
      %v134 = vadd.s32 %v121, 104
      %v135 = vadd.s32 %v121, 112
      %v136 = vadd.s32 %v121, 120
      %v137 = vadd.s32 %v121, 128
      %v138 = vadd.s32 %v121, 136
      %v139 = vadd.s32 %v121, 144
      %v140 = vadd.s32 %v121, 152
      %v141 = vadd.s32 %v121, 160
      %v142 = vadd.s32 %v121, 168
      %v143 = vadd.s32 %v121, 176
      %v144 = vadd.s32 %v121, 184
      %v145 = vadd.s32 %v121, 192
      %v146 = vadd.s32 %v121, 200
      %v147 = vadd.s32 %v121, 208
      %v148 = vadd.s32 %v121, 216
      %v149 = vadd.s32 %v121, 224
      %v150 = vadd.s32 %v121, 232
      %v151 = vadd.s32 %v121, 240
      %v152 = vadd.s32 %v121, 248
      %vm153 = vcmp.eq.s32.totalorder %v121, %v118
      %vm154 = vcmp.eq.s32.totalorder %v121, %v119
      %vm155 = vcmp.eq.s32.totalorder %v122, %v118
      %vm156 = vcmp.eq.s32.totalorder %v122, %v119
      %vm157 = vcmp.eq.s32.totalorder %v123, %v118
      %vm158 = vcmp.eq.s32.totalorder %v123, %v119
      %vm159 = vcmp.eq.s32.totalorder %v124, %v118
      %vm160 = vcmp.eq.s32.totalorder %v124, %v119
      %vm161 = vcmp.eq.s32.totalorder %v125, %v118
      %vm162 = vcmp.eq.s32.totalorder %v125, %v119
      %vm163 = vcmp.eq.s32.totalorder %v126, %v118
      %vm164 = vcmp.eq.s32.totalorder %v126, %v119
      %vm165 = vcmp.eq.s32.totalorder %v127, %v118
      %vm166 = vcmp.eq.s32.totalorder %v127, %v119
      %vm167 = vcmp.eq.s32.totalorder %v128, %v118
      %vm168 = vcmp.eq.s32.totalorder %v128, %v119
      %vm169 = vcmp.eq.s32.totalorder %v129, %v118
      %vm170 = vcmp.eq.s32.totalorder %v129, %v119
      %vm171 = vcmp.eq.s32.totalorder %v130, %v118
      %vm172 = vcmp.eq.s32.totalorder %v130, %v119
      %vm173 = vcmp.eq.s32.totalorder %v131, %v118
      %vm174 = vcmp.eq.s32.totalorder %v131, %v119
      %vm175 = vcmp.eq.s32.totalorder %v132, %v118
      %vm176 = vcmp.eq.s32.totalorder %v132, %v119
      %vm177 = vcmp.eq.s32.totalorder %v133, %v118
      %vm178 = vcmp.eq.s32.totalorder %v133, %v119
      %vm179 = vcmp.eq.s32.totalorder %v134, %v118
      %vm180 = vcmp.eq.s32.totalorder %v134, %v119
      %vm181 = vcmp.eq.s32.totalorder %v135, %v118
      %vm182 = vcmp.eq.s32.totalorder %v135, %v119
      %vm183 = vcmp.eq.s32.totalorder %v136, %v118
      %vm184 = vcmp.eq.s32.totalorder %v136, %v119
      %vm185 = vcmp.eq.s32.totalorder %v137, %v118
      %vm186 = vcmp.eq.s32.totalorder %v137, %v119
      %vm187 = vcmp.eq.s32.totalorder %v138, %v118
      %vm188 = vcmp.eq.s32.totalorder %v138, %v119
      %vm189 = vcmp.eq.s32.totalorder %v139, %v118
      %vm190 = vcmp.eq.s32.totalorder %v139, %v119
      %vm191 = vcmp.eq.s32.totalorder %v140, %v118
      %vm192 = vcmp.eq.s32.totalorder %v140, %v119
      %vm193 = vcmp.eq.s32.totalorder %v141, %v118
      %vm194 = vcmp.eq.s32.totalorder %v141, %v119
      %vm195 = vcmp.eq.s32.totalorder %v142, %v118
      %vm196 = vcmp.eq.s32.totalorder %v142, %v119
      %vm197 = vcmp.eq.s32.totalorder %v143, %v118
      %vm198 = vcmp.eq.s32.totalorder %v143, %v119
      %vm199 = vcmp.eq.s32.totalorder %v144, %v118
      %vm200 = vcmp.eq.s32.totalorder %v144, %v119
      %vm201 = vcmp.eq.s32.totalorder %v145, %v118
      %vm202 = vcmp.eq.s32.totalorder %v145, %v119
      %vm203 = vcmp.eq.s32.totalorder %v146, %v118
      %vm204 = vcmp.eq.s32.totalorder %v146, %v119
      %vm205 = vcmp.eq.s32.totalorder %v147, %v118
      %vm206 = vcmp.eq.s32.totalorder %v147, %v119
      %vm207 = vcmp.eq.s32.totalorder %v148, %v118
      %vm208 = vcmp.eq.s32.totalorder %v148, %v119
      %vm209 = vcmp.eq.s32.totalorder %v149, %v118
      %vm210 = vcmp.eq.s32.totalorder %v149, %v119
      %vm211 = vcmp.eq.s32.totalorder %v150, %v118
      %vm212 = vcmp.eq.s32.totalorder %v150, %v119
      %vm213 = vcmp.eq.s32.totalorder %v151, %v118
      %vm214 = vcmp.eq.s32.totalorder %v151, %v119
      %vm215 = vcmp.eq.s32.totalorder %v152, %v118
      %vm216 = vcmp.eq.s32.totalorder %v152, %v119
      %v217 = vsel %vm153, 1.0, 0.0
      %v218 = vsel %vm154, 1.0, 0.0
      %v219 = vsel %vm155, 1.0, 0.0
      %v220 = vsel %vm156, 1.0, 0.0
      %v221 = vsel %vm157, 1.0, 0.0
      %v222 = vsel %vm158, 1.0, 0.0
      %v223 = vsel %vm159, 1.0, 0.0
      %v224 = vsel %vm160, 1.0, 0.0
      %v225 = vsel %vm161, 1.0, 0.0
      %v226 = vsel %vm162, 1.0, 0.0
      %v227 = vsel %vm163, 1.0, 0.0
      %v228 = vsel %vm164, 1.0, 0.0
      %v229 = vsel %vm165, 1.0, 0.0
      %v230 = vsel %vm166, 1.0, 0.0
      %v231 = vsel %vm167, 1.0, 0.0
      %v232 = vsel %vm168, 1.0, 0.0
      %v233 = vsel %vm169, 1.0, 0.0
      %v234 = vsel %vm170, 1.0, 0.0
      %v235 = vsel %vm171, 1.0, 0.0
      %v236 = vsel %vm172, 1.0, 0.0
      %v237 = vsel %vm173, 1.0, 0.0
      %v238 = vsel %vm174, 1.0, 0.0
      %v239 = vsel %vm175, 1.0, 0.0
      %v240 = vsel %vm176, 1.0, 0.0
      %v241 = vsel %vm177, 1.0, 0.0
      %v242 = vsel %vm178, 1.0, 0.0
      %v243 = vsel %vm179, 1.0, 0.0
      %v244 = vsel %vm180, 1.0, 0.0
      %v245 = vsel %vm181, 1.0, 0.0
      %v246 = vsel %vm182, 1.0, 0.0
      %v247 = vsel %vm183, 1.0, 0.0
      %v248 = vsel %vm184, 1.0, 0.0
      %v249 = vsel %vm185, 1.0, 0.0
      %v250 = vsel %vm186, 1.0, 0.0
      %v251 = vsel %vm187, 1.0, 0.0
      %v252 = vsel %vm188, 1.0, 0.0
      %v253 = vsel %vm189, 1.0, 0.0
      %v254 = vsel %vm190, 1.0, 0.0
      %v255 = vsel %vm191, 1.0, 0.0
      %v256 = vsel %vm192, 1.0, 0.0
      %v257 = vsel %vm193, 1.0, 0.0
      %v258 = vsel %vm194, 1.0, 0.0
      %v259 = vsel %vm195, 1.0, 0.0
      %v260 = vsel %vm196, 1.0, 0.0
      %v261 = vsel %vm197, 1.0, 0.0
      %v262 = vsel %vm198, 1.0, 0.0
      %v263 = vsel %vm199, 1.0, 0.0
      %v264 = vsel %vm200, 1.0, 0.0
      %v265 = vsel %vm201, 1.0, 0.0
      %v266 = vsel %vm202, 1.0, 0.0
      %v267 = vsel %vm203, 1.0, 0.0
      %v268 = vsel %vm204, 1.0, 0.0
      %v269 = vsel %vm205, 1.0, 0.0
      %v270 = vsel %vm206, 1.0, 0.0
      %v271 = vsel %vm207, 1.0, 0.0
      %v272 = vsel %vm208, 1.0, 0.0
      %v273 = vsel %vm209, 1.0, 0.0
      %v274 = vsel %vm210, 1.0, 0.0
      %v275 = vsel %vm211, 1.0, 0.0
      %v276 = vsel %vm212, 1.0, 0.0
      %v277 = vsel %vm213, 1.0, 0.0
      %v278 = vsel %vm214, 1.0, 0.0
      %v279 = vsel %vm215, 1.0, 0.0
      %v280 = vsel %vm216, 1.0, 0.0
      %281 = vst [vmem:[#allocation2] sm:$0xff] %v217
      %282 = vst [vmem:[#allocation2 + $0x8] sm:$0xff] %v218
      %283 = vst [vmem:[#allocation2 + $0x10] sm:$0xff] %v219
      %284 = vst [vmem:[#allocation2 + $0x18] sm:$0xff] %v220
      %285 = vst [vmem:[#allocation2 + $0x20] sm:$0xff] %v221
      %286 = vst [vmem:[#allocation2 + $0x28] sm:$0xff] %v222
      %287 = vst [vmem:[#allocation2 + $0x30] sm:$0xff] %v223
      %288 = vst [vmem:[#allocation2 + $0x38] sm:$0xff] %v224
      %289 = vst [vmem:[#allocation2 + $0x40] sm:$0xff] %v225
      %290 = vst [vmem:[#allocation2 + $0x48] sm:$0xff] %v226
      %291 = vst [vmem:[#allocation2 + $0x50] sm:$0xff] %v227
      %292 = vst [vmem:[#allocation2 + $0x58] sm:$0xff] %v228
      %293 = vst [vmem:[#allocation2 + $0x60] sm:$0xff] %v229
      %294 = vst [vmem:[#allocation2 + $0x68] sm:$0xff] %v230
      %295 = vst [vmem:[#allocation2 + $0x70] sm:$0xff] %v231
      %296 = vst [vmem:[#allocation2 + $0x78] sm:$0xff] %v232
      %297 = vst [vmem:[#allocation2 + $0x80] sm:$0xff] %v233
      %298 = vst [vmem:[#allocation2 + $0x88] sm:$0xff] %v234
      %299 = vst [vmem:[#allocation2 + $0x90] sm:$0xff] %v235
      %300 = vst [vmem:[#allocation2 + $0x98] sm:$0xff] %v236
      %301 = vst [vmem:[#allocation2 + $0xa0] sm:$0xff] %v237
      %302 = vst [vmem:[#allocation2 + $0xa8] sm:$0xff] %v238
      %303 = vst [vmem:[#allocation2 + $0xb0] sm:$0xff] %v239
      %304 = vst [vmem:[#allocation2 + $0xb8] sm:$0xff] %v240
      %305 = vst [vmem:[#allocation2 + $0xc0] sm:$0xff] %v241
      %306 = vst [vmem:[#allocation2 + $0xc8] sm:$0xff] %v242
      %307 = vst [vmem:[#allocation2 + $0xd0] sm:$0xff] %v243
      %308 = vst [vmem:[#allocation2 + $0xd8] sm:$0xff] %v244
      %309 = vst [vmem:[#allocation2 + $0xe0] sm:$0xff] %v245
      %310 = vst [vmem:[#allocation2 + $0xe8] sm:$0xff] %v246
      %311 = vst [vmem:[#allocation2 + $0xf0] sm:$0xff] %v247
      %312 = vst [vmem:[#allocation2 + $0xf8] sm:$0xff] %v248
      %313 = vst [vmem:[#allocation2 + $0x100] sm:$0xff] %v249
      %314 = vst [vmem:[#allocation2 + $0x108] sm:$0xff] %v250
      %315 = vst [vmem:[#allocation2 + $0x110] sm:$0xff] %v251
      %316 = vst [vmem:[#allocation2 + $0x118] sm:$0xff] %v252
      %317 = vst [vmem:[#allocation2 + $0x120] sm:$0xff] %v253
      %318 = vst [vmem:[#allocation2 + $0x128] sm:$0xff] %v254
      %319 = vst [vmem:[#allocation2 + $0x130] sm:$0xff] %v255
      %320 = vst [vmem:[#allocation2 + $0x138] sm:$0xff] %v256
      %321 = vst [vmem:[#allocation2 + $0x140] sm:$0xff] %v257
      %322 = vst [vmem:[#allocation2 + $0x148] sm:$0xff] %v258
      %323 = vst [vmem:[#allocation2 + $0x150] sm:$0xff] %v259
      %324 = vst [vmem:[#allocation2 + $0x158] sm:$0xff] %v260
      %325 = vst [vmem:[#allocation2 + $0x160] sm:$0xff] %v261
      %326 = vst [vmem:[#allocation2 + $0x168] sm:$0xff] %v262
      %327 = vst [vmem:[#allocation2 + $0x170] sm:$0xff] %v263
      %328 = vst [vmem:[#allocation2 + $0x178] sm:$0xff] %v264
      %329 = vst [vmem:[#allocation2 + $0x180] sm:$0xff] %v265
      %330 = vst [vmem:[#allocation2 + $0x188] sm:$0xff] %v266
      %331 = vst [vmem:[#allocation2 + $0x190] sm:$0xff] %v267
      %332 = vst [vmem:[#allocation2 + $0x198] sm:$0xff] %v268
      %333 = vst [vmem:[#allocation2 + $0x1a0] sm:$0xff] %v269
      %334 = vst [vmem:[#allocation2 + $0x1a8] sm:$0xff] %v270
      %335 = vst [vmem:[#allocation2 + $0x1b0] sm:$0xff] %v271
      %336 = vst [vmem:[#allocation2 + $0x1b8] sm:$0xff] %v272
      %337 = vst [vmem:[#allocation2 + $0x1c0] sm:$0xff] %v273
      %338 = vst [vmem:[#allocation2 + $0x1c8] sm:$0xff] %v274
      %339 = vst [vmem:[#allocation2 + $0x1d0] sm:$0xff] %v275
      %340 = vst [vmem:[#allocation2 + $0x1d8] sm:$0xff] %v276
      %341 = vst [vmem:[#allocation2 + $0x1e0] sm:$0xff] %v277
      %342 = vst [vmem:[#allocation2 + $0x1e8] sm:$0xff] %v278
      %343 = vst [vmem:[#allocation2 + $0x1f0] sm:$0xff] %v279
      %344 = vst [vmem:[#allocation2 + $0x1f8] sm:$0xff] %v280
    $region21: #{tpu_custom_call.1} parent=1 // pred_fallthru
      _
    %v345 = vld [vmem:[#allocation7] sm:$0xff]
    %v346 = vld [vmem:[#allocation7 + $0x8] sm:$0xff]
    %v347 = vld [vmem:[#allocation2] sm:$0xff]
    %v348 = vld [vmem:[#allocation2 + $0x8] sm:$0xff]
    %v349 = vld [vmem:[#allocation2 + $0x10] sm:$0xff]
    %v350 = vld [vmem:[#allocation2 + $0x18] sm:$0xff]
    %v351 = vld [vmem:[#allocation2 + $0x20] sm:$0xff]
    %v352 = vld [vmem:[#allocation2 + $0x28] sm:$0xff]
    %v353 = vld [vmem:[#allocation2 + $0x30] sm:$0xff]
    %v354 = vld [vmem:[#allocation2 + $0x38] sm:$0xff]
    %v355 = vld [vmem:[#allocation2 + $0x40] sm:$0xff]
    %v356 = vld [vmem:[#allocation2 + $0x48] sm:$0xff]
    %v357 = vld [vmem:[#allocation2 + $0x50] sm:$0xff]
    %v358 = vld [vmem:[#allocation2 + $0x58] sm:$0xff]
    %v359 = vld [vmem:[#allocation2 + $0x60] sm:$0xff]
    %v360 = vld [vmem:[#allocation2 + $0x68] sm:$0xff]
    %v361 = vld [vmem:[#allocation2 + $0x70] sm:$0xff]
    %v362 = vld [vmem:[#allocation2 + $0x78] sm:$0xff]
    %v363 = vld [vmem:[#allocation2 + $0x80] sm:$0xff]
    %v364 = vld [vmem:[#allocation2 + $0x88] sm:$0xff]
    %v365 = vld [vmem:[#allocation2 + $0x90] sm:$0xff]
    %v366 = vld [vmem:[#allocation2 + $0x98] sm:$0xff]
    %v367 = vld [vmem:[#allocation2 + $0xa0] sm:$0xff]
    %v368 = vld [vmem:[#allocation2 + $0xa8] sm:$0xff]
    %v369 = vld [vmem:[#allocation2 + $0xb0] sm:$0xff]
    %v370 = vld [vmem:[#allocation2 + $0xb8] sm:$0xff]
    %v371 = vld [vmem:[#allocation2 + $0xc0] sm:$0xff]
    %v372 = vld [vmem:[#allocation2 + $0xc8] sm:$0xff]
    %v373 = vld [vmem:[#allocation2 + $0xd0] sm:$0xff]
    %v374 = vld [vmem:[#allocation2 + $0xd8] sm:$0xff]
    %v375 = vld [vmem:[#allocation2 + $0xe0] sm:$0xff]
    %v376 = vld [vmem:[#allocation2 + $0xe8] sm:$0xff]
    %v377 = vld [vmem:[#allocation2 + $0xf0] sm:$0xff]
    %v378 = vld [vmem:[#allocation2 + $0xf8] sm:$0xff]
    %v379 = vld [vmem:[#allocation2 + $0x100] sm:$0xff]
    %v380 = vld [vmem:[#allocation2 + $0x108] sm:$0xff]
    %v381 = vld [vmem:[#allocation2 + $0x110] sm:$0xff]
    %v382 = vld [vmem:[#allocation2 + $0x118] sm:$0xff]
    %v383 = vld [vmem:[#allocation2 + $0x120] sm:$0xff]
    %v384 = vld [vmem:[#allocation2 + $0x128] sm:$0xff]
    %v385 = vld [vmem:[#allocation2 + $0x130] sm:$0xff]
    %v386 = vld [vmem:[#allocation2 + $0x138] sm:$0xff]
    %v387 = vld [vmem:[#allocation2 + $0x140] sm:$0xff]
    %v388 = vld [vmem:[#allocation2 + $0x148] sm:$0xff]
    %v389 = vld [vmem:[#allocation2 + $0x150] sm:$0xff]
    %v390 = vld [vmem:[#allocation2 + $0x158] sm:$0xff]
    %v391 = vld [vmem:[#allocation2 + $0x160] sm:$0xff]
    %v392 = vld [vmem:[#allocation2 + $0x168] sm:$0xff]
    %v393 = vld [vmem:[#allocation2 + $0x170] sm:$0xff]
    %v394 = vld [vmem:[#allocation2 + $0x178] sm:$0xff]
    %v395 = vld [vmem:[#allocation2 + $0x180] sm:$0xff]
    %v396 = vld [vmem:[#allocation2 + $0x188] sm:$0xff]
    %v397 = vld [vmem:[#allocation2 + $0x190] sm:$0xff]
    %v398 = vld [vmem:[#allocation2 + $0x198] sm:$0xff]
    %v399 = vld [vmem:[#allocation2 + $0x1a0] sm:$0xff]
    %v400 = vld [vmem:[#allocation2 + $0x1a8] sm:$0xff]
    %v401 = vld [vmem:[#allocation2 + $0x1b0] sm:$0xff]
    %v402 = vld [vmem:[#allocation2 + $0x1b8] sm:$0xff]
    %v403 = vld [vmem:[#allocation2 + $0x1c0] sm:$0xff]
    %v404 = vld [vmem:[#allocation2 + $0x1c8] sm:$0xff]
    %v405 = vld [vmem:[#allocation2 + $0x1d0] sm:$0xff]
    %v406 = vld [vmem:[#allocation2 + $0x1d8] sm:$0xff]
    %v407 = vld [vmem:[#allocation2 + $0x1e0] sm:$0xff]
    %v408 = vld [vmem:[#allocation2 + $0x1e8] sm:$0xff]
    %v409 = vld [vmem:[#allocation2 + $0x1f0] sm:$0xff]
    %v410 = vld [vmem:[#allocation2 + $0x1f8] sm:$0xff]
    %411 = vmatprep.subr.mxu0 %v348
    %412 = vmatpush1.msra.mxu0 %v347
    %413 = vmatprep.subr.mxu0 %v350
    %414 = vmatpush1.msra.mxu0 %v349
    %415 = vmatprep.subr.mxu0 %v352
    %416 = vmatpush1.msra.mxu0 %v351
    %417 = vmatprep.subr.mxu0 %v354
    %418 = vmatpush1.msra.mxu0 %v353
    %419 = vmatprep.subr.mxu0 %v356
    %420 = vmatpush1.msra.mxu0 %v355
    %421 = vmatprep.subr.mxu0 %v358
    %422 = vmatpush1.msra.mxu0 %v357
    %423 = vmatprep.subr.mxu0 %v360
    %424 = vmatpush1.msra.mxu0 %v359
    %425 = vmatprep.subr.mxu0 %v362
    %426 = vmatpush1.msra.mxu0 %v361
    %427 = vmatprep.subr.mxu0 %v364
    %428 = vmatpush1.msra.mxu0 %v363
    %429 = vmatprep.subr.mxu0 %v366
    %430 = vmatpush1.msra.mxu0 %v365
    %431 = vmatprep.subr.mxu0 %v368
    %432 = vmatpush1.msra.mxu0 %v367
    %433 = vmatprep.subr.mxu0 %v370
    %434 = vmatpush1.msra.mxu0 %v369
    %435 = vmatprep.subr.mxu0 %v372
    %436 = vmatpush1.msra.mxu0 %v371
    %437 = vmatprep.subr.mxu0 %v374
    %438 = vmatpush1.msra.mxu0 %v373
    %439 = vmatprep.subr.mxu0 %v376
    %440 = vmatpush1.msra.mxu0 %v375
    %441 = vmatprep.subr.mxu0 %v378
    %442 = vmatpush1.msra.mxu0 %v377
    %443 = vmatprep.subr.mxu0 %v380
    %444 = vmatpush1.msra.mxu0 %v379
    %445 = vmatprep.subr.mxu0 %v382
    %446 = vmatpush1.msra.mxu0 %v381
    %447 = vmatprep.subr.mxu0 %v384
    %448 = vmatpush1.msra.mxu0 %v383
    %449 = vmatprep.subr.mxu0 %v386
    %450 = vmatpush1.msra.mxu0 %v385
    %451 = vmatprep.subr.mxu0 %v388
    %452 = vmatpush1.msra.mxu0 %v387
    %453 = vmatprep.subr.mxu0 %v390
    %454 = vmatpush1.msra.mxu0 %v389
    %455 = vmatprep.subr.mxu0 %v392
    %456 = vmatpush1.msra.mxu0 %v391
    %457 = vmatprep.subr.mxu0 %v394
    %458 = vmatpush1.msra.mxu0 %v393
    %459 = vmatprep.subr.mxu0 %v396
    %460 = vmatpush1.msra.mxu0 %v395
    %461 = vmatprep.subr.mxu0 %v398
    %462 = vmatpush1.msra.mxu0 %v397
    %463 = vmatprep.subr.mxu0 %v400
    %464 = vmatpush1.msra.mxu0 %v399
    %465 = vmatprep.subr.mxu0 %v402
    %466 = vmatpush1.msra.mxu0 %v401
    %467 = vmatprep.subr.mxu0 %v404
    %468 = vmatpush1.msra.mxu0 %v403
    %469 = vmatprep.subr.mxu0 %v406
    %470 = vmatpush1.msra.mxu0 %v405
    %471 = vmatprep.subr.mxu0 %v408
    %472 = vmatpush1.msra.mxu0 %v407
    %473 = vmatprep.subr.mxu0 %v410
    %474 = vmatpush1.msra.mxu0 %v409
    %475 = vmatprep.mubr.f32.mxu0 %v346
    %476 = vmatmul.mubr.f32.gmra.mrb[0].mxu0 %v345
    %v477 = vpop.f32.mrb[0].mxu0
    %v478 = vadd.f32 0.0, %v477
    %v479 = vpop.f32.mrb[0].mxu0
    %v480 = vadd.f32 0.0, %v479
    %481 = vdwg.mxu0
    %482 = vst [vmem:[#allocation8] sm:$0xff] %v478
    %483 = vst [vmem:[#allocation8 + $0x8] sm:$0xff] %v480
    // Predicated region
    $region22: #{tpu_custom_call.1} parent=1 // pred_check
      _
    $region23: #{tpu_custom_call.1} parent=1 // pred_check_branch
      %485 = sbr.rel (0) target = $region25
    $region24: #{tpu_custom_call.1} parent=1 // pred_region
      %s487 = ssub.s32 256, 256
      %488 = vsyncadd [#allocation5], %s487
      %s490 = sshll.u32 [#allocation8], 4
      %s491 = int_to_ptr.vmem [resolvable:$true] %s490
      %493 = dma.vmem_to_hbm [thread:$0]  %s491, 256, %s2, [#allocation5]
    $region25: #{tpu_custom_call.1} parent=1 // pred_fallthru
      _
    // Predicated region
    $region26: #{tpu_custom_call.1} parent=1 // pred_check
      _
    $region27: #{tpu_custom_call.1} parent=1 // pred_check_branch
      %495 = sbr.rel (0) target = $region29
    $region28: #{tpu_custom_call.1} parent=1 // pred_region
      %496 = dma.done [#allocation5], 256
    $region29: #{tpu_custom_call.1} parent=1 // pred_fallthru
      _
    %497 = vsyncpa [#allocation4], 1
    %498 = vsyncpa [#allocation5], 1
    %499 = vsyncpa [#allocation6], 1

</llo_original>
